<compile_context>
chip_gen: v6e
topology: v6e:2x2x1
jax: 0.10.0
libtpu: 0.0.40
codegen_flags: <defaults>
</compile_context>

<pallas_src>
import jax
import jax.numpy as jnp
from jax.experimental import pallas as pl
from jax.experimental.pallas import tpu as pltpu

C1 = 8          # x1 channels  (module: x = 8)
C2 = 3          # x2 channels  (module: z = 3)
CC = C1 + C2    # channels of v4 = cat(x1, x2) = 11
C_OUT2 = CC     # conv2 output channels (so v7 = v4 + v6 is well defined)
C_OUT3 = C1     # conv3 output channels (module: x = 8)

# Per-pixel-per-image HBM traffic in bytes (f32): inputs 8+3, outputs 11+11+8.
_BYTES_PER_PIXEL = 4 * (C1 + C2 + C_OUT2 + C_OUT2 + C_OUT3)   # 164


def model2_kernel(x1_ref, x2_ref,
                  w2a_ref, w2b_ref, b2_ref, w3a_ref, w3b_ref, b3_ref,
                  v5_ref, v6_ref, v8_ref):
    x1 = x1_ref[...]                       # (Nb, C1, TM)  pixels on the lane axis
    x2 = x2_ref[...]                       # (Nb, C2, TM)
    nb = x1.shape[0]

    # Tiny weights broadcast once per step so every contraction is a plain
    # batched matmul ('boi,bim->bom') -- same lowering pattern as the
    # flash-attention 'bqd,bkd->bqk' einsums.
    w2a = jnp.broadcast_to(w2a_ref[...][None], (nb, C_OUT2, C1))
    w2b = jnp.broadcast_to(w2b_ref[...][None], (nb, C_OUT2, C2))
    w3a = jnp.broadcast_to(w3a_ref[...][None], (nb, C_OUT3, C1))
    w3b = jnp.broadcast_to(w3b_ref[...][None], (nb, C_OUT3, C2))

    # v5 = conv2(cat(x1, x2)): contraction split over the concat boundary, so
    # v4 never exists in HBM or VMEM.
    v5 = (jnp.einsum('boi,bim->bom', w2a, x1, preferred_element_type=jnp.float32)
          + jnp.einsum('boi,bim->bom', w2b, x2, preferred_element_type=jnp.float32)
          + b2_ref[...])                   # (Nb, C_OUT2, TM)

    # sigmoid(v) = 0.5 * tanh(v/2) + 0.5: single EUP transcendental per element
    # (no VPU Newton divide) and bounded for padded/garbage tail lanes.
    v6 = 0.5 * jnp.tanh(0.5 * v5) + 0.5

    # v7 = cat(x1, x2) + v6 ; v8 = conv3(v7), again split over the boundary.
    v8 = (jnp.einsum('boi,bim->bom', w3a, x1 + v6[:, :C1, :],
                     preferred_element_type=jnp.float32)
          + jnp.einsum('boi,bim->bom', w3b, x2 + v6[:, C1:, :],
                       preferred_element_type=jnp.float32)
          + b3_ref[...])                   # (Nb, C_OUT3, TM)

    v5_ref[...] = v5.astype(v5_ref.dtype)
    v6_ref[...] = v6.astype(v6_ref.dtype)
    v8_ref[...] = v8.astype(v8_ref.dtype)


def _choose_tiling(N, HW, tm_max):
    """Static choice of (nb images per step, tm pixels per step)."""
    if HW > tm_max:
        # Large images: tile the pixel axis with balanced blocks, 1 image/step.
        nb = 1
        n_pix0 = -(-HW // tm_max)
        tm = ((-(-HW // n_pix0) + 127) // 128) * 128       # multiple of 128
    else:
        # Small images: whole image per step; pack several batch elements per
        # step so each grid step still moves a few MB (amortizes the ~0.35 us
        # fixed per-step pipeline cost).
        tm = HW
        nb = min(N, max(1, tm_max // HW))
        if nb >= N and N > 1:
            nb = -(-N // 2)     # keep >= 2 grid steps so both v7x TCs get work
        while N % nb:            # exact division: no partial batch blocks
            nb -= 1
    return nb, tm


def model2_forward(x1, x2, w2, b2, w3, b3, tm_max=32768):
    """x1: (N, C1, H, W), x2: (N, C2, H, W); w*: (C_in, C_out); b*: (C_out,).

    tm_max: max pixels (images * pixels-per-image) per grid step.  32768 ->
    ~5.4 MB HBM traffic per step, ~10.8 MB double-buffered in VMEM, which fits
    the default scoped-VMEM limit on v5e (16 MiB), v6e (32 MiB) and v7x
    (32 MiB scoped / 64 MiB physical) without raising vmem_limit_bytes.
    """
    N, _, H, W = x1.shape
    HW = H * W
    nb, tm = _choose_tiling(N, HW, tm_max)
    n_bat = N // nb                         # nb always divides N
    n_pix = pl.cdiv(HW, tm)                 # partial pixel tail masked by Pallas

    # NCHW -> (N, C, H*W): free reshape, pixels land on the 128-lane axis.
    x1f = x1.reshape(N, C1, HW)
    x2f = x2.reshape(N, C2, HW)

    # Pre-transpose + split weights over the concat boundary (tiny, one-off).
    w2a = jnp.transpose(w2[:C1])           # (C_OUT2, C1)
    w2b = jnp.transpose(w2[C1:])           # (C_OUT2, C2)
    w3a = jnp.transpose(w3[:C1])           # (C_OUT3, C1)
    w3b = jnp.transpose(w3[C1:])           # (C_OUT3, C2)
    b2c = b2.reshape(C_OUT2, 1)
    b3c = b3.reshape(C_OUT3, 1)

    def pix_spec(c):      # (nb images, c channels, tm pixels) tile
        return pl.BlockSpec((nb, c, tm), lambda b, p: (b, 0, p))

    def par_spec(shape):  # whole (tiny) parameter, same block every step
        return pl.BlockSpec(shape, lambda b, p: (0, 0))

    # Advisory roofline hint so XLA schedules neighbours around this
    # bandwidth-heavy custom call.
    cost = pl.CostEstimate(
        flops=2 * (C_OUT2 * CC + C_OUT3 * CC) * N * HW,
        transcendentals=C_OUT2 * N * HW,
        bytes_accessed=_BYTES_PER_PIXEL * N * HW,
    )

    v5f, v6f, v8f = pl.pallas_call(
        model2_kernel,
        out_shape=(
            jax.ShapeDtypeStruct((N, C_OUT2, HW), jnp.float32),
            jax.ShapeDtypeStruct((N, C_OUT2, HW), jnp.float32),
            jax.ShapeDtypeStruct((N, C_OUT3, HW), jnp.float32),
        ),
        grid=(n_bat, n_pix),
        in_specs=[
            pix_spec(C1),                  # x1 tile
            pix_spec(C2),                  # x2 tile
            par_spec((C_OUT2, C1)),        # w2a
            par_spec((C_OUT2, C2)),        # w2b
            par_spec((C_OUT2, 1)),         # b2
            par_spec((C_OUT3, C1)),        # w3a
            par_spec((C_OUT3, C2)),        # w3b
            par_spec((C_OUT3, 1)),         # b3
        ],
        out_specs=(pix_spec(C_OUT2), pix_spec(C_OUT2), pix_spec(C_OUT3)),
        compiler_params=pltpu.CompilerParams(
            dimension_semantics=("parallel", "parallel")),
        cost_estimate=cost,
    )(x1f, x2f, w2a, w2b, b2c, w3a, w3b, b3c)

    # (N, C, H*W) -> NCHW: free reshape, no transpose.
    return (v5f.reshape(N, C_OUT2, H, W),
            v6f.reshape(N, C_OUT2, H, W),
            v8f.reshape(N, C_OUT3, H, W))


def ref_forward(x1, x2, w1, b1, w2, b2, w3, b3):
    """Plain-JAX reference mirroring the (repaired) PyTorch forward."""
    def conv1x1t(x, w, b):   # x: NCHW, w: (Cin, Cout), b: (Cout,)
        return jnp.einsum("nihw,io->nohw", x, w) + b[None, :, None, None]
    v1 = conv1x1t(x1, w1, b1)
    v2 = jax.nn.sigmoid(v1)
    _v3 = v1 * v2            # dead w.r.t. the returned outputs
    v4 = jnp.concatenate([x1, x2], axis=1)
    v5 = conv1x1t(v4, w2, b2)
    v6 = jax.nn.sigmoid(v5)
    v7 = v4 + v6
    v8 = conv1x1t(v7, w3, b3)
    return v5, v6, v8


if __name__ == "__main__":
    key = jax.random.PRNGKey(0)
    ks = jax.random.split(key, 8)

    # Deterministic parameter init (uniform ~ 1/sqrt(fan_in), like torch default scale).
    def init_w(k, cin, cout):
        bound = 1.0 / jnp.sqrt(jnp.float32(cin))
        return jax.random.uniform(k, (cin, cout), jnp.float32, -bound, bound)

    def init_b(k, cin, cout):
        bound = 1.0 / jnp.sqrt(jnp.float32(cin))
        return jax.random.uniform(k, (cout,), jnp.float32, -bound, bound)

    # conv1 params (w1/b1) feed only the dead v1/v2/v3 branch -> reference only.
    w1 = init_w(ks[2], C1, C1);       b1 = init_b(ks[3], C1, C1)
    w2 = init_w(ks[4], CC, C_OUT2);   b2 = init_b(ks[5], CC, C_OUT2)
    w3 = init_w(ks[6], CC, C_OUT3);   b3 = init_b(ks[7], CC, C_OUT3)

    ok = True
    # (2,16,16): small primary case; (4,16,16): exercises batch packing (nb=2);
    # (1,200,200): exercises pixel tiling with a masked tail block.
    for (N, H, W) in [(2, 16, 16), (4, 16, 16), (1, 200, 200)]:
        kx = jax.random.fold_in(ks[0], N * 10000 + H)
        kz = jax.random.fold_in(ks[1], N * 10000 + H)
        x1 = jax.random.normal(kx, (N, C1, H, W), jnp.float32)
        x2 = jax.random.normal(kz, (N, C2, H, W), jnp.float32)

        v5, v6, v8 = model2_forward(x1, x2, w2, b2, w3, b3)
        jax.block_until_ready((v5, v6, v8))

        r5, r6, r8 = ref_forward(x1, x2, w1, b1, w2, b2, w3, b3)
        assert v5.shape == (N, C_OUT2, H, W)
        assert v6.shape == (N, C_OUT2, H, W)
        assert v8.shape == (N, C_OUT3, H, W)
        ok &= bool(jnp.allclose(v5, r5, atol=1e-3, rtol=1e-3))
        ok &= bool(jnp.allclose(v6, r6, atol=1e-3, rtol=1e-3))
        ok &= bool(jnp.allclose(v8, r8, atol=1e-3, rtol=1e-3))

    assert ok
    print("KERNEL_OK")
</pallas_src>

<mosaic_0001>
module attributes {stable_mosaic.version = 11 : i64} {
  func.func @model2_kernel(%arg0: i32, %arg1: i32, %arg2: memref<1x8x256xf32, #tpu.memory_space<vmem>>, %arg3: memref<1x3x256xf32, #tpu.memory_space<vmem>>, %arg4: memref<11x8xf32, #tpu.memory_space<vmem>>, %arg5: memref<11x3xf32, #tpu.memory_space<vmem>>, %arg6: memref<11x1xf32, #tpu.memory_space<vmem>>, %arg7: memref<8x8xf32, #tpu.memory_space<vmem>>, %arg8: memref<8x3xf32, #tpu.memory_space<vmem>>, %arg9: memref<8x1xf32, #tpu.memory_space<vmem>>, %arg10: memref<1x11x256xf32, #tpu.memory_space<vmem>>, %arg11: memref<1x11x256xf32, #tpu.memory_space<vmem>>, %arg12: memref<1x8x256xf32, #tpu.memory_space<vmem>>) attributes {dimension_semantics = [#tpu.dimension_semantics<parallel>, #tpu.dimension_semantics<parallel>], iteration_bounds = array<i64: 2, 1>, scalar_prefetch = 0 : i64, scratch_operands = 0 : i64, tpu.core_type = #tpu.core_type<tc>, window_params = [{transform_indices = @transform_0, window_bounds = array<i64: 1, 8, 256>}, {transform_indices = @transform_1, window_bounds = array<i64: 1, 3, 256>}, {pipeline_mode = #tpu.pipeline_mode<synchronous>, transform_indices = @transform_2, window_bounds = array<i64: 11, 8>}, {pipeline_mode = #tpu.pipeline_mode<synchronous>, transform_indices = @transform_3, window_bounds = array<i64: 11, 3>}, {pipeline_mode = #tpu.pipeline_mode<synchronous>, transform_indices = @transform_4, window_bounds = array<i64: 11, 1>}, {pipeline_mode = #tpu.pipeline_mode<synchronous>, transform_indices = @transform_5, window_bounds = array<i64: 8, 8>}, {pipeline_mode = #tpu.pipeline_mode<synchronous>, transform_indices = @transform_6, window_bounds = array<i64: 8, 3>}, {pipeline_mode = #tpu.pipeline_mode<synchronous>, transform_indices = @transform_7, window_bounds = array<i64: 8, 1>}, {transform_indices = @transform_8, window_bounds = array<i64: 1, 11, 256>}, {transform_indices = @transform_9, window_bounds = array<i64: 1, 11, 256>}, {transform_indices = @transform_10, window_bounds = array<i64: 1, 8, 256>}]} {
    %c0 = arith.constant 0 : index
    %c0_0 = arith.constant 0 : index
    %c0_1 = arith.constant 0 : index
    %0 = vector.load %arg2[%c0, %c0_0, %c0_1] : memref<1x8x256xf32, #tpu.memory_space<vmem>>, vector<1x8x256xf32>
    %c0_2 = arith.constant 0 : index
    %c0_3 = arith.constant 0 : index
    %c0_4 = arith.constant 0 : index
    %1 = vector.load %arg3[%c0_2, %c0_3, %c0_4] : memref<1x3x256xf32, #tpu.memory_space<vmem>>, vector<1x3x256xf32>
    %c0_5 = arith.constant 0 : index
    %c0_6 = arith.constant 0 : index
    %2 = vector.load %arg4[%c0_5, %c0_6] : memref<11x8xf32, #tpu.memory_space<vmem>>, vector<11x8xf32>
    %3 = vector.shape_cast %2 : vector<11x8xf32> to vector<1x11x8xf32>
    %c0_7 = arith.constant 0 : index
    %c0_8 = arith.constant 0 : index
    %4 = vector.load %arg5[%c0_7, %c0_8] : memref<11x3xf32, #tpu.memory_space<vmem>>, vector<11x3xf32>
    %5 = vector.shape_cast %4 : vector<11x3xf32> to vector<1x11x3xf32>
    %c0_9 = arith.constant 0 : index
    %c0_10 = arith.constant 0 : index
    %6 = vector.load %arg7[%c0_9, %c0_10] : memref<8x8xf32, #tpu.memory_space<vmem>>, vector<8x8xf32>
    %7 = vector.shape_cast %6 : vector<8x8xf32> to vector<1x8x8xf32>
    %c0_11 = arith.constant 0 : index
    %c0_12 = arith.constant 0 : index
    %8 = vector.load %arg8[%c0_11, %c0_12] : memref<8x3xf32, #tpu.memory_space<vmem>>, vector<8x3xf32>
    %9 = vector.shape_cast %8 : vector<8x3xf32> to vector<1x8x3xf32>
    "tpu.trace_start"() <{level = 10 : i32, message = "boi,bim->bom"}> : () -> ()
    %cst = arith.constant dense<0.000000e+00> : vector<1x11x256xf32>
    %10 = tpu.matmul %3, %0, %cst {dimension_numbers = #tpu.dot_dimension_numbers<[2], [1], [1], [2], [0, 0, 0, 1, 1, 2], [0], [0]>} : vector<1x11x8xf32>, vector<1x8x256xf32>, vector<1x11x256xf32> -> vector<1x11x256xf32>
    %cst_13 = arith.constant dense<0.000000e+00> : vector<1x11x256xf32>
    %11 = tpu.matmul %5, %1, %cst_13 {dimension_numbers = #tpu.dot_dimension_numbers<[2], [1], [1], [2], [0, 0, 0, 1, 1, 2], [0], [0]>} : vector<1x11x3xf32>, vector<1x3x256xf32>, vector<1x11x256xf32> -> vector<1x11x256xf32>
    "tpu.trace_stop"() : () -> ()
    %12 = arith.addf %10, %11 : vector<1x11x256xf32>
    %c0_14 = arith.constant 0 : index
    %c0_15 = arith.constant 0 : index
    %13 = vector.load %arg6[%c0_14, %c0_15] : memref<11x1xf32, #tpu.memory_space<vmem>>, vector<11x1xf32>
    %14 = vector.shape_cast %13 : vector<11x1xf32> to vector<1x11x1xf32>
    %15 = vector.broadcast %14 : vector<1x11x1xf32> to vector<1x11x256xf32>
    %16 = arith.addf %12, %15 : vector<1x11x256xf32>
    %cst_16 = arith.constant 5.000000e-01 : f32
    %17 = vector.broadcast %cst_16 : f32 to vector<1x11x256xf32>
    %18 = arith.mulf %17, %16 : vector<1x11x256xf32>
    %19 = math.tanh %18 : vector<1x11x256xf32>
    %cst_17 = arith.constant 5.000000e-01 : f32
    %20 = vector.broadcast %cst_17 : f32 to vector<1x11x256xf32>
    %21 = arith.mulf %20, %19 : vector<1x11x256xf32>
    %cst_18 = arith.constant 5.000000e-01 : f32
    %22 = vector.broadcast %cst_18 : f32 to vector<1x11x256xf32>
    %23 = arith.addf %21, %22 : vector<1x11x256xf32>
    %24 = vector.extract_strided_slice %23 {offsets = [0, 0, 0], sizes = [1, 8, 256], strides = [1, 1, 1]} : vector<1x11x256xf32> to vector<1x8x256xf32>
    %25 = arith.addf %0, %24 : vector<1x8x256xf32>
    "tpu.trace_start"() <{level = 10 : i32, message = "boi,bim->bom"}> : () -> ()
    %cst_19 = arith.constant dense<0.000000e+00> : vector<1x8x256xf32>
    %26 = tpu.matmul %7, %25, %cst_19 {dimension_numbers = #tpu.dot_dimension_numbers<[2], [1], [1], [2], [0, 0, 0, 1, 1, 2], [0], [0]>} : vector<1x8x8xf32>, vector<1x8x256xf32>, vector<1x8x256xf32> -> vector<1x8x256xf32>
    "tpu.trace_stop"() : () -> ()
    %27 = vector.extract_strided_slice %23 {offsets = [0, 8, 0], sizes = [1, 3, 256], strides = [1, 1, 1]} : vector<1x11x256xf32> to vector<1x3x256xf32>
    %28 = arith.addf %1, %27 : vector<1x3x256xf32>
    "tpu.trace_start"() <{level = 10 : i32, message = "boi,bim->bom"}> : () -> ()
    %cst_20 = arith.constant dense<0.000000e+00> : vector<1x8x256xf32>
    %29 = tpu.matmul %9, %28, %cst_20 {dimension_numbers = #tpu.dot_dimension_numbers<[2], [1], [1], [2], [0, 0, 0, 1, 1, 2], [0], [0]>} : vector<1x8x3xf32>, vector<1x3x256xf32>, vector<1x8x256xf32> -> vector<1x8x256xf32>
    "tpu.trace_stop"() : () -> ()
    %30 = arith.addf %26, %29 : vector<1x8x256xf32>
    %c0_21 = arith.constant 0 : index
    %c0_22 = arith.constant 0 : index
    %31 = vector.load %arg9[%c0_21, %c0_22] : memref<8x1xf32, #tpu.memory_space<vmem>>, vector<8x1xf32>
    %32 = vector.shape_cast %31 : vector<8x1xf32> to vector<1x8x1xf32>
    %33 = vector.broadcast %32 : vector<1x8x1xf32> to vector<1x8x256xf32>
    %34 = arith.addf %30, %33 : vector<1x8x256xf32>
    %c0_23 = arith.constant 0 : index
    %c0_24 = arith.constant 0 : index
    %c0_25 = arith.constant 0 : index
    %35 = vector.load %arg10[%c0_23, %c0_24, %c0_25] : memref<1x11x256xf32, #tpu.memory_space<vmem>>, vector<1x11x256xf32>
    tpu.vector_store %arg10[%c0_23, %c0_24, %c0_25], %16 {strides = array<i32>} : memref<1x11x256xf32, #tpu.memory_space<vmem>>, vector<1x11x256xf32>,
    %c0_26 = arith.constant 0 : index
    %c0_27 = arith.constant 0 : index
    %c0_28 = arith.constant 0 : index
    %36 = vector.load %arg11[%c0_26, %c0_27, %c0_28] : memref<1x11x256xf32, #tpu.memory_space<vmem>>, vector<1x11x256xf32>
    tpu.vector_store %arg11[%c0_26, %c0_27, %c0_28], %23 {strides = array<i32>} : memref<1x11x256xf32, #tpu.memory_space<vmem>>, vector<1x11x256xf32>,
    %c0_29 = arith.constant 0 : index
    %c0_30 = arith.constant 0 : index
    %c0_31 = arith.constant 0 : index
    %37 = vector.load %arg12[%c0_29, %c0_30, %c0_31] : memref<1x8x256xf32, #tpu.memory_space<vmem>>, vector<1x8x256xf32>
    tpu.vector_store %arg12[%c0_29, %c0_30, %c0_31], %34 {strides = array<i32>} : memref<1x8x256xf32, #tpu.memory_space<vmem>>, vector<1x8x256xf32>,
    return
  }
  func.func @transform_0(%arg0: i32, %arg1: i32) -> (i32, i32, i32) {
    %c0_i32 = arith.constant 0 : i32
    %c0_i32_0 = arith.constant 0 : i32
    return %arg0, %c0_i32, %arg1 : i32, i32, i32
  }
  func.func @transform_1(%arg0: i32, %arg1: i32) -> (i32, i32, i32) {
    %c0_i32 = arith.constant 0 : i32
    %c0_i32_0 = arith.constant 0 : i32
    return %arg0, %c0_i32, %arg1 : i32, i32, i32
  }
  func.func @transform_2(%arg0: i32, %arg1: i32) -> (i32, i32) {
    %c0_i32 = arith.constant 0 : i32
    %c0_i32_0 = arith.constant 0 : i32
    %c0_i32_1 = arith.constant 0 : i32
    return %c0_i32, %c0_i32_0 : i32, i32
  }
  func.func @transform_3(%arg0: i32, %arg1: i32) -> (i32, i32) {
    %c0_i32 = arith.constant 0 : i32
    %c0_i32_0 = arith.constant 0 : i32
    %c0_i32_1 = arith.constant 0 : i32
    return %c0_i32, %c0_i32_0 : i32, i32
  }
  func.func @transform_4(%arg0: i32, %arg1: i32) -> (i32, i32) {
    %c0_i32 = arith.constant 0 : i32
    %c0_i32_0 = arith.constant 0 : i32
    %c0_i32_1 = arith.constant 0 : i32
    return %c0_i32, %c0_i32_0 : i32, i32
  }
  func.func @transform_5(%arg0: i32, %arg1: i32) -> (i32, i32) {
    %c0_i32 = arith.constant 0 : i32
    %c0_i32_0 = arith.constant 0 : i32
    %c0_i32_1 = arith.constant 0 : i32
    return %c0_i32, %c0_i32_0 : i32, i32
  }
  func.func @transform_6(%arg0: i32, %arg1: i32) -> (i32, i32) {
    %c0_i32 = arith.constant 0 : i32
    %c0_i32_0 = arith.constant 0 : i32
    %c0_i32_1 = arith.constant 0 : i32
    return %c0_i32, %c0_i32_0 : i32, i32
  }
  func.func @transform_7(%arg0: i32, %arg1: i32) -> (i32, i32) {
    %c0_i32 = arith.constant 0 : i32
    %c0_i32_0 = arith.constant 0 : i32
    %c0_i32_1 = arith.constant 0 : i32
    return %c0_i32, %c0_i32_0 : i32, i32
  }
  func.func @transform_8(%arg0: i32, %arg1: i32) -> (i32, i32, i32) {
    %c0_i32 = arith.constant 0 : i32
    %c0_i32_0 = arith.constant 0 : i32
    return %arg0, %c0_i32, %arg1 : i32, i32, i32
  }
  func.func @transform_9(%arg0: i32, %arg1: i32) -> (i32, i32, i32) {
    %c0_i32 = arith.constant 0 : i32
    %c0_i32_0 = arith.constant 0 : i32
    return %arg0, %c0_i32, %arg1 : i32, i32, i32
  }
  func.func @transform_10(%arg0: i32, %arg1: i32) -> (i32, i32, i32) {
    %c0_i32 = arith.constant 0 : i32
    %c0_i32_0 = arith.constant 0 : i32
    return %arg0, %c0_i32, %arg1 : i32, i32, i32
  }
}

</mosaic_0001>

<llo_original>
// kernel: tpu_custom_call.1
$region0: #{tpu_custom_call.1}
  #allocation0 [shape = 'u32[]', space=smem, size = 0x4, offset = 0x4, fixed_abs, tag = 'smem constant byte address 0x4 - core index']
  #allocation1 [shape = 'u32[144,128]{1,0:T(1,128)}', space=vmem, size = 0x12000, scoped, tag = 'internal scratch']
  %s0 = inlined_call_operand.vmem [shape: f32[2,8,256], index: 0, kind: input, shape index: {}]
  %s1 = inlined_call_operand.vmem [shape: f32[2,3,256], index: 1, kind: input, shape index: {}]
  %s2 = inlined_call_operand.vmem [shape: f32[11,8], index: 2, kind: input, shape index: {}]
  %s3 = inlined_call_operand.vmem [shape: f32[11,3], index: 3, kind: input, shape index: {}]
  %s4 = inlined_call_operand.vmem [shape: f32[11,1], index: 4, kind: input, shape index: {}]
  %s5 = inlined_call_operand.vmem [shape: f32[8,8], index: 5, kind: input, shape index: {}]
  %s6 = inlined_call_operand.vmem [shape: f32[8,3], index: 6, kind: input, shape index: {}]
  %s7 = inlined_call_operand.vmem [shape: f32[8,1], index: 7, kind: input, shape index: {}]
  %s8 = inlined_call_operand.vmem [shape: f32[2,11,256], index: 8, kind: output, shape index: {0}]
  %s9 = inlined_call_operand.vmem [shape: f32[2,11,256], index: 9, kind: output, shape index: {1}]
  %s10 = inlined_call_operand.hbm [shape: f32[2,8,256], index: 10, kind: output, shape index: {2}]
  %11 = xla_tuple %s8, %s9, %s10
  %s12 = sld [smem:[#allocation0]]
  $region81: #{tpu_custom_call.1} parent=0
    _
  %s14 = ssub.s32 1, %s12
  %s15 = scalar_select 0, %s14, %s12
  $region1: #{tpu_custom_call.1} parent=0
    #allocation2 [shape = 'u8[16384]{0}', space=vmem, size = 0x4000, scoped, tag = 'output window, operand 2']
    #allocation3 [shape = 's32[2]{0}', space=sflag, size = 0x8, scoped, tag = 'scoped memory for tpu_custom_call.1']
    %16 = vsyncpa [#allocation3], 0
    %s17 = scalar_lea.sflag [#allocation3], 1
    %18 = vsyncpa %s17, 0
    loop: start=0, step=1, limit=4
    $region2: #{tpu_custom_call.1} parent=1 // loop_pre_header
      _
    $region3: #{tpu_custom_call.1} parent=1 // loop_header
      %s20 = sphi 0, %s24
      %p21 = scmp.ge.s32.totalorder %s20, 4
      %s27 = sphi 0, %s39
      %s28 = sphi 0, %s35
      %s29 = sphi 0, %s27
      %s30 = sphi 0, %s28
      %s31 = sphi 0, %s29
      %s32 = sphi 0, %s30
      %s44 = sphi 0, %s46
      %s47 = sphi 0, %s44
      %s48 = sphi 0, %s47
      %s64 = sphi 0, %s48
      %s72 = sphi 0, %s74
      %s75 = sphi 0, %s72
      %s76 = sphi 0, %s75
      %s92 = sphi 0, %s76
      %s96 = sphi 0, %s96
      %s98 = sphi 0, %s96
      %s99 = sphi 0, %s98
      %s113 = sphi 0, %s99
      %s117 = sphi 0, %s117
      %s119 = sphi 0, %s117
      %s120 = sphi 0, %s119
      %s134 = sphi 0, %s120
      %s138 = sphi 0, %s138
      %s140 = sphi 0, %s138
      %s141 = sphi 0, %s140
      %s155 = sphi 0, %s141
      %s159 = sphi 0, %s159
      %s161 = sphi 0, %s159
      %s162 = sphi 0, %s161
      %s176 = sphi 0, %s162
      %s180 = sphi 0, %s180
      %s182 = sphi 0, %s180
      %s183 = sphi 0, %s182
      %s197 = sphi 0, %s183
      %s201 = sphi 0, %s201
      %s203 = sphi 0, %s201
      %s204 = sphi 0, %s203
      %s218 = sphi 0, %s204
      %s226 = sphi 0, %s228
      %s229 = sphi 0, %s226
      %s230 = sphi 0, %s229
      %s246 = sphi 0, %s230
      %s254 = sphi 0, %s256
      %s257 = sphi 0, %s254
      %s258 = sphi 0, %s257
      %s274 = sphi 0, %s258
      %s282 = sphi 0, %s284
      %s285 = sphi 0, %s282
      %s286 = sphi 0, %s285
      %s302 = sphi 0, %s286
    $region4: #{tpu_custom_call.1} parent=1 // loop_header_branch
      %23 = sbr.rel (%p21) target = $region8
    $region5: #{tpu_custom_call.1} parent=1 // loop_body
      %s25 = ssub.s32 %s20, 1
      %s26 = ssub.s32 %s20, 2
      %s33 = sadd.s32 1, %s28
      %p34 = scmp.ge.s32.totalorder %s33, 1
      %s35 = scalar_select %p34, 0, %s33
      %s36 = sadd.s32 1, %s27
      %s37 = scalar_select %p34, %s36, %s27
      %p38 = scmp.ge.s32.totalorder %s37, 2
      %s39 = scalar_select %p38, 0, %s37
      %s40 = ssub.s32 %s27, %s39
      %s41 = ssub.s32 %s28, %s35
      %s42 = sor.u32 %s40, %s41
      %p43 = scmp.eq.s32.totalorder %s42, 0
      %s45 = sadd.s32 %s44, 1
      %s46 = scalar_select %p43, %s44, %s45
      %p49 = pneg %p43
      %p50 = scmp.eq.s32.totalorder %s20, 1
      %p51 = por %p49, %p50
      %p52 = scmp.ne.s32.totalorder %s44, %s47
      %p53 = scmp.eq.s32.totalorder %s20, 0
      %p54 = por %p52, %p53
      %p55 = scmp.ne.s32.totalorder %s44, %s47
      %p56 = scmp.eq.s32.totalorder %s25, 1
      %p57 = por %p55, %p56
      %p58 = scmp.ne.s32.totalorder %s47, %s48
      %p59 = scmp.eq.s32.totalorder %s25, 0
      %p60 = por %p58, %p59
      %p61 = scmp.ne.s32.totalorder %s47, %s48
      %p62 = scmp.eq.s32.totalorder %s26, 1
      %p63 = por %p61, %p62
      %p65 = scmp.ne.s32.totalorder %s48, %s64
      %p66 = scmp.eq.s32.totalorder %s26, 0
      %p67 = por %p65, %p66
      %s68 = ssub.s32 %s27, %s39
      %s69 = ssub.s32 %s28, %s35
      %s70 = sor.u32 %s68, %s69
      %p71 = scmp.eq.s32.totalorder %s70, 0
      %s73 = sadd.s32 %s72, 1
      %s74 = scalar_select %p71, %s72, %s73
      %p77 = pneg %p71
      %p78 = scmp.eq.s32.totalorder %s20, 1
      %p79 = por %p77, %p78
      %p80 = scmp.ne.s32.totalorder %s72, %s75
      %p81 = scmp.eq.s32.totalorder %s20, 0
      %p82 = por %p80, %p81
      %p83 = scmp.ne.s32.totalorder %s72, %s75
      %p84 = scmp.eq.s32.totalorder %s25, 1
      %p85 = por %p83, %p84
      %p86 = scmp.ne.s32.totalorder %s75, %s76
      %p87 = scmp.eq.s32.totalorder %s25, 0
      %p88 = por %p86, %p87
      %p89 = scmp.ne.s32.totalorder %s75, %s76
      %p90 = scmp.eq.s32.totalorder %s26, 1
      %p91 = por %p89, %p90
      %p93 = scmp.ne.s32.totalorder %s76, %s92
      %p94 = scmp.eq.s32.totalorder %s26, 0
      %p95 = por %p93, %p94
      %s97 = sadd.s32 %s96, 1
      %p100 = scmp.eq.s32.totalorder %s20, 1
      %p101 = scmp.ne.s32.totalorder %s96, %s98
      %p102 = scmp.eq.s32.totalorder %s20, 0
      %p103 = por %p101, %p102
      %p104 = scmp.ne.s32.totalorder %s96, %s98
      %p105 = scmp.eq.s32.totalorder %s25, 1
      %p106 = por %p104, %p105
      %p107 = scmp.ne.s32.totalorder %s98, %s99
      %p108 = scmp.eq.s32.totalorder %s25, 0
      %p109 = por %p107, %p108
      %p110 = scmp.ne.s32.totalorder %s98, %s99
      %p111 = scmp.eq.s32.totalorder %s26, 1
      %p112 = por %p110, %p111
      %p114 = scmp.ne.s32.totalorder %s99, %s113
      %p115 = scmp.eq.s32.totalorder %s26, 0
      %p116 = por %p114, %p115
      %s118 = sadd.s32 %s117, 1
      %p121 = scmp.eq.s32.totalorder %s20, 1
      %p122 = scmp.ne.s32.totalorder %s117, %s119
      %p123 = scmp.eq.s32.totalorder %s20, 0
      %p124 = por %p122, %p123
      %p125 = scmp.ne.s32.totalorder %s117, %s119
      %p126 = scmp.eq.s32.totalorder %s25, 1
      %p127 = por %p125, %p126
      %p128 = scmp.ne.s32.totalorder %s119, %s120
      %p129 = scmp.eq.s32.totalorder %s25, 0
      %p130 = por %p128, %p129
      %p131 = scmp.ne.s32.totalorder %s119, %s120
      %p132 = scmp.eq.s32.totalorder %s26, 1
      %p133 = por %p131, %p132
      %p135 = scmp.ne.s32.totalorder %s120, %s134
      %p136 = scmp.eq.s32.totalorder %s26, 0
      %p137 = por %p135, %p136
      %s139 = sadd.s32 %s138, 1
      %p142 = scmp.eq.s32.totalorder %s20, 1
      %p143 = scmp.ne.s32.totalorder %s138, %s140
      %p144 = scmp.eq.s32.totalorder %s20, 0
      %p145 = por %p143, %p144
      %p146 = scmp.ne.s32.totalorder %s138, %s140
      %p147 = scmp.eq.s32.totalorder %s25, 1
      %p148 = por %p146, %p147
      %p149 = scmp.ne.s32.totalorder %s140, %s141
      %p150 = scmp.eq.s32.totalorder %s25, 0
      %p151 = por %p149, %p150
      %p152 = scmp.ne.s32.totalorder %s140, %s141
      %p153 = scmp.eq.s32.totalorder %s26, 1
      %p154 = por %p152, %p153
      %p156 = scmp.ne.s32.totalorder %s141, %s155
      %p157 = scmp.eq.s32.totalorder %s26, 0
      %p158 = por %p156, %p157
      %s160 = sadd.s32 %s159, 1
      %p163 = scmp.eq.s32.totalorder %s20, 1
      %p164 = scmp.ne.s32.totalorder %s159, %s161
      %p165 = scmp.eq.s32.totalorder %s20, 0
      %p166 = por %p164, %p165
      %p167 = scmp.ne.s32.totalorder %s159, %s161
      %p168 = scmp.eq.s32.totalorder %s25, 1
      %p169 = por %p167, %p168
      %p170 = scmp.ne.s32.totalorder %s161, %s162
      %p171 = scmp.eq.s32.totalorder %s25, 0
      %p172 = por %p170, %p171
      %p173 = scmp.ne.s32.totalorder %s161, %s162
      %p174 = scmp.eq.s32.totalorder %s26, 1
      %p175 = por %p173, %p174
      %p177 = scmp.ne.s32.totalorder %s162, %s176
      %p178 = scmp.eq.s32.totalorder %s26, 0
      %p179 = por %p177, %p178
      %s181 = sadd.s32 %s180, 1
      %p184 = scmp.eq.s32.totalorder %s20, 1
      %p185 = scmp.ne.s32.totalorder %s180, %s182
      %p186 = scmp.eq.s32.totalorder %s20, 0
      %p187 = por %p185, %p186
      %p188 = scmp.ne.s32.totalorder %s180, %s182
      %p189 = scmp.eq.s32.totalorder %s25, 1
      %p190 = por %p188, %p189
      %p191 = scmp.ne.s32.totalorder %s182, %s183
      %p192 = scmp.eq.s32.totalorder %s25, 0
      %p193 = por %p191, %p192
      %p194 = scmp.ne.s32.totalorder %s182, %s183
      %p195 = scmp.eq.s32.totalorder %s26, 1
      %p196 = por %p194, %p195
      %p198 = scmp.ne.s32.totalorder %s183, %s197
      %p199 = scmp.eq.s32.totalorder %s26, 0
      %p200 = por %p198, %p199
      %s202 = sadd.s32 %s201, 1
      %p205 = scmp.eq.s32.totalorder %s20, 1
      %p206 = scmp.ne.s32.totalorder %s201, %s203
      %p207 = scmp.eq.s32.totalorder %s20, 0
      %p208 = por %p206, %p207
      %p209 = scmp.ne.s32.totalorder %s201, %s203
      %p210 = scmp.eq.s32.totalorder %s25, 1
      %p211 = por %p209, %p210
      %p212 = scmp.ne.s32.totalorder %s203, %s204
      %p213 = scmp.eq.s32.totalorder %s25, 0
      %p214 = por %p212, %p213
      %p215 = scmp.ne.s32.totalorder %s203, %s204
      %p216 = scmp.eq.s32.totalorder %s26, 1
      %p217 = por %p215, %p216
      %p219 = scmp.ne.s32.totalorder %s204, %s218
      %p220 = scmp.eq.s32.totalorder %s26, 0
      %p221 = por %p219, %p220
      %s222 = ssub.s32 %s27, %s39
      %s223 = ssub.s32 %s28, %s35
      %s224 = sor.u32 %s222, %s223
      %p225 = scmp.eq.s32.totalorder %s224, 0
      %s227 = sadd.s32 %s226, 1
      %s228 = scalar_select %p225, %s226, %s227
      %p231 = pneg %p225
      %p232 = scmp.eq.s32.totalorder %s20, 1
      %p233 = por %p231, %p232
      %p234 = scmp.ne.s32.totalorder %s226, %s229
      %p235 = scmp.eq.s32.totalorder %s20, 0
      %p236 = por %p234, %p235
      %p237 = scmp.ne.s32.totalorder %s226, %s229
      %p238 = scmp.eq.s32.totalorder %s25, 1
      %p239 = por %p237, %p238
      %p240 = scmp.ne.s32.totalorder %s229, %s230
      %p241 = scmp.eq.s32.totalorder %s25, 0
      %p242 = por %p240, %p241
      %p243 = scmp.ne.s32.totalorder %s229, %s230
      %p244 = scmp.eq.s32.totalorder %s26, 1
      %p245 = por %p243, %p244
      %p247 = scmp.ne.s32.totalorder %s230, %s246
      %p248 = scmp.eq.s32.totalorder %s26, 0
      %p249 = por %p247, %p248
      %s250 = ssub.s32 %s27, %s39
      %s251 = ssub.s32 %s28, %s35
      %s252 = sor.u32 %s250, %s251
      %p253 = scmp.eq.s32.totalorder %s252, 0
      %s255 = sadd.s32 %s254, 1
      %s256 = scalar_select %p253, %s254, %s255
      %p259 = pneg %p253
      %p260 = scmp.eq.s32.totalorder %s20, 1
      %p261 = por %p259, %p260
      %p262 = scmp.ne.s32.totalorder %s254, %s257
      %p263 = scmp.eq.s32.totalorder %s20, 0
      %p264 = por %p262, %p263
      %p265 = scmp.ne.s32.totalorder %s254, %s257
      %p266 = scmp.eq.s32.totalorder %s25, 1
      %p267 = por %p265, %p266
      %p268 = scmp.ne.s32.totalorder %s257, %s258
      %p269 = scmp.eq.s32.totalorder %s25, 0
      %p270 = por %p268, %p269
      %p271 = scmp.ne.s32.totalorder %s257, %s258
      %p272 = scmp.eq.s32.totalorder %s26, 1
      %p273 = por %p271, %p272
      %p275 = scmp.ne.s32.totalorder %s258, %s274
      %p276 = scmp.eq.s32.totalorder %s26, 0
      %p277 = por %p275, %p276
      %s278 = ssub.s32 %s27, %s39
      %s279 = ssub.s32 %s28, %s35
      %s280 = sor.u32 %s278, %s279
      %p281 = scmp.eq.s32.totalorder %s280, 0
      %s283 = sadd.s32 %s282, 1
      %s284 = scalar_select %p281, %s282, %s283
      %p287 = pneg %p281
      %p288 = scmp.eq.s32.totalorder %s20, 1
      %p289 = por %p287, %p288
      %p290 = scmp.ne.s32.totalorder %s282, %s285
      %p291 = scmp.eq.s32.totalorder %s20, 0
      %p292 = por %p290, %p291
      %p293 = scmp.ne.s32.totalorder %s282, %s285
      %p294 = scmp.eq.s32.totalorder %s25, 1
      %p295 = por %p293, %p294
      %p296 = scmp.ne.s32.totalorder %s285, %s286
      %p297 = scmp.eq.s32.totalorder %s25, 0
      %p298 = por %p296, %p297
      %p299 = scmp.ne.s32.totalorder %s285, %s286
      %p300 = scmp.eq.s32.totalorder %s26, 1
      %p301 = por %p299, %p300
      %p303 = scmp.ne.s32.totalorder %s286, %s302
      %p304 = scmp.eq.s32.totalorder %s26, 0
      %p305 = por %p303, %p304
      %p306 = scmp.le.s32.totalorder 1, %s20
      %p307 = scmp.lt.s32.totalorder %s20, 3
      %p308 = pnand %p306, %p307
      %p309 = pneg %p308
      // Predicated region
      $region9: #{tpu_custom_call.1} parent=5 // pred_check
        _
      $region10: #{tpu_custom_call.1} parent=5 // pred_check_branch
        %311 = sbr.rel (%p308) target = $region12
      $region11: #{tpu_custom_call.1} parent=5 // pred_region
        %s312 = ssub.s32 %s20, 1
        // Predicated region
        $region13: #{tpu_custom_call.1} parent=11 // pred_check
          %p313 = pneg %p109
        $region14: #{tpu_custom_call.1} parent=11 // pred_check_branch
          %315 = sbr.rel (%p313) target = $region16
        $region15: #{tpu_custom_call.1} parent=11 // pred_region
          _
        $region16: #{tpu_custom_call.1} parent=11 // pred_fallthru
          _
        // Predicated region
        $region17: #{tpu_custom_call.1} parent=11 // pred_check
          %p316 = pneg %p130
        $region18: #{tpu_custom_call.1} parent=11 // pred_check_branch
          %318 = sbr.rel (%p316) target = $region20
        $region19: #{tpu_custom_call.1} parent=11 // pred_region
          _
        $region20: #{tpu_custom_call.1} parent=11 // pred_fallthru
          _
        // Predicated region
        $region21: #{tpu_custom_call.1} parent=11 // pred_check
          %p319 = pneg %p151
        $region22: #{tpu_custom_call.1} parent=11 // pred_check_branch
          %321 = sbr.rel (%p319) target = $region24
        $region23: #{tpu_custom_call.1} parent=11 // pred_region
          _
        $region24: #{tpu_custom_call.1} parent=11 // pred_fallthru
          _
        // Predicated region
        $region25: #{tpu_custom_call.1} parent=11 // pred_check
          %p322 = pneg %p172
        $region26: #{tpu_custom_call.1} parent=11 // pred_check_branch
          %324 = sbr.rel (%p322) target = $region28
        $region27: #{tpu_custom_call.1} parent=11 // pred_region
          _
        $region28: #{tpu_custom_call.1} parent=11 // pred_fallthru
          _
        // Predicated region
        $region29: #{tpu_custom_call.1} parent=11 // pred_check
          %p325 = pneg %p193
        $region30: #{tpu_custom_call.1} parent=11 // pred_check_branch
          %327 = sbr.rel (%p325) target = $region32
        $region31: #{tpu_custom_call.1} parent=11 // pred_region
          _
        $region32: #{tpu_custom_call.1} parent=11 // pred_fallthru
          _
        // Predicated region
        $region33: #{tpu_custom_call.1} parent=11 // pred_check
          %p328 = pneg %p214
        $region34: #{tpu_custom_call.1} parent=11 // pred_check_branch
          %330 = sbr.rel (%p328) target = $region36
        $region35: #{tpu_custom_call.1} parent=11 // pred_region
          _
        $region36: #{tpu_custom_call.1} parent=11 // pred_fallthru
          _
      $region12: #{tpu_custom_call.1} parent=5 // pred_fallthru
        _
      %p331 = scmp.lt.s32.totalorder %s20, 2
      // Predicated region
      $region37: #{tpu_custom_call.1} parent=5 // pred_check
        %p332 = pneg %p331
      $region38: #{tpu_custom_call.1} parent=5 // pred_check_branch
        %334 = sbr.rel (%p332) target = $region40
      $region39: #{tpu_custom_call.1} parent=5 // pred_region
        // Predicated region
        $region41: #{tpu_custom_call.1} parent=39 // pred_check
          %p335 = pneg %p54
        $region42: #{tpu_custom_call.1} parent=39 // pred_check_branch
          %337 = sbr.rel (%p335) target = $region44
        $region43: #{tpu_custom_call.1} parent=39 // pred_region
          %s338 = smul.u32 2, %s28
          %p339 = scmp.lt.s32.totalorder %s27, 1
          %s340 = scalar_select %p339, %s27, 1
          %p341 = scmp.lt.s32.totalorder %s338, 1
          %s342 = scalar_select %p341, %s338, 1
          %s343 = smul.addr %s340, 2
          %s344 = sadd.s32 %s342, %s343
          %s345 = smul.addr %s344, 8
          %s346 = scalar_lea.vmem %s0, %s345
          %s347 = smul.u32 2, %s28
        $region44: #{tpu_custom_call.1} parent=39 // pred_fallthru
          _
        // Predicated region
        $region45: #{tpu_custom_call.1} parent=39 // pred_check
          %p348 = pneg %p82
        $region46: #{tpu_custom_call.1} parent=39 // pred_check_branch
          %350 = sbr.rel (%p348) target = $region48
        $region47: #{tpu_custom_call.1} parent=39 // pred_region
          %s351 = smul.u32 2, %s28
          %p352 = scmp.lt.s32.totalorder %s27, 1
          %s353 = scalar_select %p352, %s27, 1
          %p354 = scmp.lt.s32.totalorder %s351, 1
          %s355 = scalar_select %p354, %s351, 1
          %s356 = smul.addr %s353, 2
          %s357 = sadd.s32 %s355, %s356
          %s358 = smul.addr %s357, 4
          %s359 = scalar_lea.vmem %s1, %s358
          %s360 = smul.u32 2, %s28
        $region48: #{tpu_custom_call.1} parent=39 // pred_fallthru
          _
      $region40: #{tpu_custom_call.1} parent=5 // pred_fallthru
        _
      %p361 = scmp.le.s32.totalorder 1, %s20
      %p362 = scmp.lt.s32.totalorder %s20, 3
      %p363 = pnand %p361, %p362
      %p364 = pneg %p363
      // Predicated region
      $region49: #{tpu_custom_call.1} parent=5 // pred_check
        _
      $region50: #{tpu_custom_call.1} parent=5 // pred_check_branch
        %366 = sbr.rel (%p363) target = $region52
      $region51: #{tpu_custom_call.1} parent=5 // pred_region
        %s367 = ssub.s32 %s20, 1
        %s368 = smul.u32 2, %s30
        %p369 = scmp.lt.s32.totalorder %s29, 1
        %s370 = scalar_select %p369, %s29, 1
        %p371 = scmp.lt.s32.totalorder %s368, 1
        %s372 = scalar_select %p371, %s368, 1
        %s373 = smul.addr %s370, 2
        %s374 = sadd.s32 %s372, %s373
        %s375 = smul.addr %s374, 8
        %s376 = scalar_lea.vmem %s0, %s375
        %p377 = pneg %p60
        %p378 = pneg %p57
        %s379 = smul.u32 2, %s30
        %p380 = scmp.lt.s32.totalorder %s29, 1
        %s381 = scalar_select %p380, %s29, 1
        %p382 = scmp.lt.s32.totalorder %s379, 1
        %s383 = scalar_select %p382, %s379, 1
        %s384 = smul.addr %s381, 2
        %s385 = sadd.s32 %s383, %s384
        %s386 = smul.addr %s385, 4
        %s387 = scalar_lea.vmem %s1, %s386
        %p388 = pneg %p88
        %p389 = pneg %p85
        %p390 = pneg %p109
        %p391 = pneg %p106
        %p392 = pneg %p130
        %p393 = pneg %p127
        %p394 = pneg %p151
        %p395 = pneg %p148
        %p396 = pneg %p172
        %p397 = pneg %p169
        %p398 = pneg %p193
        %p399 = pneg %p190
        %p400 = pneg %p214
        %p401 = pneg %p211
        %p402 = pneg %p242
        %p403 = pneg %p239
        %s404 = smul.u32 2, %s30
        %p405 = scmp.lt.s32.totalorder %s29, 1
        %s406 = scalar_select %p405, %s29, 1
        %p407 = scmp.lt.s32.totalorder %s404, 1
        %s408 = scalar_select %p407, %s404, 1
        %s409 = smul.addr %s406, 4
        %s410 = sadd.s32 %s408, %s409
        %s411 = smul.addr %s410, 8
        %s412 = scalar_lea.vmem %s8, %s411
        %p413 = pneg %p270
        %p414 = pneg %p267
        %s415 = smul.u32 2, %s30
        %p416 = scmp.lt.s32.totalorder %s29, 1
        %s417 = scalar_select %p416, %s29, 1
        %p418 = scmp.lt.s32.totalorder %s415, 1
        %s419 = scalar_select %p418, %s415, 1
        %s420 = smul.addr %s417, 4
        %s421 = sadd.s32 %s419, %s420
        %s422 = smul.addr %s421, 8
        %s423 = scalar_lea.vmem %s9, %s422
        %p424 = pneg %p298
        %p425 = pneg %p295
        %s426 = sand.u32 %s285, 1
        %s427 = scalar_lea.sflag [#allocation3], %s426
        %s428 = sand.u32 %s285, 1
        %s429 = smul.addr %s428, 16
        %s430 = scalar_lea.vmem [#allocation2], %s429
        %s431 = smul.u32 2, %s30
        %p432 = scmp.lt.s32.totalorder %s29, 1
        %s433 = scalar_select %p432, %s29, 1
        %p434 = scmp.lt.s32.totalorder %s431, 1
        %s435 = scalar_select %p434, %s431, 1
        %s436 = smul.addr %s433, 2
        %s437 = sadd.s32 %s435, %s436
        %s438 = smul.addr %s437, 8
        %s439 = scalar_lea.vmem %s0, %s438
        %s440 = smul.u32 2, %s30
        %s441 = smul.u32 2, %s30
        %p442 = scmp.lt.s32.totalorder %s29, 1
        %s443 = scalar_select %p442, %s29, 1
        %p444 = scmp.lt.s32.totalorder %s441, 1
        %s445 = scalar_select %p444, %s441, 1
        %s446 = smul.addr %s443, 2
        %s447 = sadd.s32 %s445, %s446
        %s448 = smul.addr %s447, 4
        %s449 = scalar_lea.vmem %s1, %s448
        %s450 = smul.u32 2, %s30
        %s451 = smul.u32 2, %s30
        %p452 = scmp.lt.s32.totalorder %s29, 1
        %s453 = scalar_select %p452, %s29, 1
        %p454 = scmp.lt.s32.totalorder %s451, 1
        %s455 = scalar_select %p454, %s451, 1
        %s456 = smul.addr %s453, 4
        %s457 = sadd.s32 %s455, %s456
        %s458 = smul.addr %s457, 8
        %s459 = scalar_lea.vmem %s8, %s458
        %s460 = smul.u32 2, %s30
        %s461 = smul.u32 2, %s30
        %p462 = scmp.lt.s32.totalorder %s29, 1
        %s463 = scalar_select %p462, %s29, 1
        %p464 = scmp.lt.s32.totalorder %s461, 1
        %s465 = scalar_select %p464, %s461, 1
        %s466 = smul.addr %s463, 4
        %s467 = sadd.s32 %s465, %s466
        %s468 = smul.addr %s467, 8
        %s469 = scalar_lea.vmem %s9, %s468
        %s470 = smul.u32 2, %s30
        %s471 = smul.u32 2, %s30
        %v472 = vld [vmem:[%s439] sm:$0xff]
        %v473 = vld [vmem:[%s439 + $0x8] sm:$0xff]
        %v474 = vld [vmem:[%s449] sm:$0x77]
        %v475 = vld [vmem:[%s2] sm:$0xff]
        %v476 = vld [vmem:[%s2 + $0x8] sm:$0x7]
        %v477 = vld [vmem:[%s3] sm:$0xff]
        %v478 = vld [vmem:[%s3 + $0x8] sm:$0x7]
        %v479 = vld [vmem:[%s5] sm:$0xff]
        %v480 = vld [vmem:[%s6] sm:$0xff]
        %v482 = vcombine.high %v474, %v474
        %vm483 = vcmask 23552
        %v485 = vsel %vm483, %v477, 0
        %v488 = vsel %vm483, %v478, 0
        %vm490 = vcmask 1042432
        %v491 = vsel %vm490, %v474, 0
        %v493 = vsel %vm490, %v482, 0
        %495 = vmatprep.subr.mxu0 0.0
        %496 = vmatpush1.msra.mxu0 0.0
        %497 = vmatprep.subr.mxu0 0.0
        %498 = vmatpush1.msra.mxu0 0.0
        %499 = vmatprep.subr.mxu0 0.0
        %500 = vmatpush1.msra.mxu0 0.0
        %501 = vmatprep.subr.mxu0 0.0
        %502 = vmatpush1.msra.mxu0 0.0
        %503 = vmatprep.subr.mxu0 0.0
        %504 = vmatpush1.msra.mxu0 0.0
        %505 = vmatprep.subr.mxu0 0.0
        %506 = vmatpush1.msra.mxu0 0.0
        %507 = vmatprep.subr.mxu0 0.0
        %508 = vmatpush1.msra.mxu0 0.0
        %509 = vmatprep.subr.mxu0 0.0
        %510 = vmatpush1.msra.mxu0 0.0
        %511 = vmatprep.subr.mxu0 0.0
        %512 = vmatpush1.msra.mxu0 0.0
        %513 = vmatprep.subr.mxu0 0.0
        %514 = vmatpush1.msra.mxu0 0.0
        %515 = vmatprep.subr.mxu0 0.0
        %516 = vmatpush1.msra.mxu0 0.0
        %517 = vmatprep.subr.mxu0 0.0
        %518 = vmatpush1.msra.mxu0 0.0
        %519 = vmatprep.subr.mxu0 0.0
        %520 = vmatpush1.msra.mxu0 0.0
        %521 = vmatprep.subr.mxu0 0.0
        %522 = vmatpush1.msra.mxu0 0.0
        %523 = vmatprep.subr.mxu0 0.0
        %524 = vmatpush1.msra.mxu0 0.0
        %525 = vmatprep.subr.mxu0 %v493
        %526 = vmatpush1.msra.mxu0 %v491
        %527 = vmatprep.subr.mxu0 0.0
        %528 = vmatpush2.msra.mxu0 0.0
        %529 = vmatprep.subr.mxu0 0.0
        %530 = vmatpush2.msra.mxu0 0.0
        %531 = vmatprep.subr.mxu0 0.0
        %532 = vmatpush2.msra.mxu0 0.0
        %533 = vmatprep.subr.mxu0 0.0
        %534 = vmatpush2.msra.mxu0 0.0
        %535 = vmatprep.subr.mxu0 0.0
        %536 = vmatpush2.msra.mxu0 0.0
        %537 = vmatprep.subr.mxu0 0.0
        %538 = vmatpush2.msra.mxu0 0.0
        %539 = vmatprep.subr.mxu0 0.0
        %540 = vmatpush2.msra.mxu0 0.0
        %541 = vmatprep.subr.mxu0 0.0
        %542 = vmatpush2.msra.mxu0 0.0
        %543 = vmatprep.subr.mxu0 0.0
        %544 = vmatpush2.msra.mxu0 0.0
        %545 = vmatprep.subr.mxu0 0.0
        %546 = vmatpush2.msra.mxu0 0.0
        %547 = vmatprep.subr.mxu0 0.0
        %548 = vmatpush2.msra.mxu0 0.0
        %549 = vmatprep.subr.mxu0 0.0
        %550 = vmatpush2.msra.mxu0 0.0
        %551 = vmatprep.subr.mxu0 0.0
        %552 = vmatpush2.msra.mxu0 0.0
        %553 = vmatprep.subr.mxu0 0.0
        %554 = vmatpush2.msra.mxu0 0.0
        %555 = vmatprep.subr.mxu0 0.0
        %556 = vmatpush2.msra.mxu0 0.0
        %557 = vmatprep.subr.mxu0 0.0
        %558 = vmatpush2.msra.mxu0 0.0
        %559 = vmatprep.mubr.f32.mxu0 0.0
        %560 = vmatmul.mubr.f32.gmra.mxu0 %v485
        %v561 = vpop.f32.mrf.mxu0
        %v562 = vadd.f32 0.0, %v561
        %v563 = vpop.f32.mrf.mxu0
        %v564 = vadd.f32 0.0, %v563
        %565 = vmatprep.mubr.f32.mxu0 0.0
        %566 = vmatmul.mubr.f32.gmra.mxu0 %v488
        %v567 = vpop.f32.mrf.mxu0
        %v568 = vadd.f32 0.0, %v567
        %v569 = vpop.f32.mrf.mxu0
        %v570 = vadd.f32 0.0, %v569
        %571 = vdwg.mxu0
        %vm572 = vcmask 64512
        %v574 = vsel %vm572, %v475, 0
        %v577 = vsel %vm572, %v476, 0
        %579 = vmatprep.subr.mxu0 0.0
        %580 = vmatpush1.msra.mxu0 0.0
        %581 = vmatprep.subr.mxu0 0.0
        %582 = vmatpush1.msra.mxu0 0.0
        %583 = vmatprep.subr.mxu0 0.0
        %584 = vmatpush1.msra.mxu0 0.0
        %585 = vmatprep.subr.mxu0 0.0
        %586 = vmatpush1.msra.mxu0 0.0
        %587 = vmatprep.subr.mxu0 0.0
        %588 = vmatpush1.msra.mxu0 0.0
        %589 = vmatprep.subr.mxu0 0.0
        %590 = vmatpush1.msra.mxu0 0.0
        %591 = vmatprep.subr.mxu0 0.0
        %592 = vmatpush1.msra.mxu0 0.0
        %593 = vmatprep.subr.mxu0 0.0
        %594 = vmatpush1.msra.mxu0 0.0
        %595 = vmatprep.subr.mxu0 0.0
        %596 = vmatpush1.msra.mxu0 0.0
        %597 = vmatprep.subr.mxu0 0.0
        %598 = vmatpush1.msra.mxu0 0.0
        %599 = vmatprep.subr.mxu0 0.0
        %600 = vmatpush1.msra.mxu0 0.0
        %601 = vmatprep.subr.mxu0 0.0
        %602 = vmatpush1.msra.mxu0 0.0
        %603 = vmatprep.subr.mxu0 0.0
        %604 = vmatpush1.msra.mxu0 0.0
        %605 = vmatprep.subr.mxu0 0.0
        %606 = vmatpush1.msra.mxu0 0.0
        %607 = vmatprep.subr.mxu0 0.0
        %608 = vmatpush1.msra.mxu0 0.0
        %609 = vmatprep.subr.mxu0 %v473
        %610 = vmatpush1.msra.mxu0 %v472
        %611 = vmatprep.subr.mxu0 0.0
        %612 = vmatpush2.msra.mxu0 0.0
        %613 = vmatprep.subr.mxu0 0.0
        %614 = vmatpush2.msra.mxu0 0.0
        %615 = vmatprep.subr.mxu0 0.0
        %616 = vmatpush2.msra.mxu0 0.0
        %617 = vmatprep.subr.mxu0 0.0
        %618 = vmatpush2.msra.mxu0 0.0
        %619 = vmatprep.subr.mxu0 0.0
        %620 = vmatpush2.msra.mxu0 0.0
        %621 = vmatprep.subr.mxu0 0.0
        %622 = vmatpush2.msra.mxu0 0.0
        %623 = vmatprep.subr.mxu0 0.0
        %624 = vmatpush2.msra.mxu0 0.0
        %625 = vmatprep.subr.mxu0 0.0
        %626 = vmatpush2.msra.mxu0 0.0
        %627 = vmatprep.subr.mxu0 0.0
        %628 = vmatpush2.msra.mxu0 0.0
        %629 = vmatprep.subr.mxu0 0.0
        %630 = vmatpush2.msra.mxu0 0.0
        %631 = vmatprep.subr.mxu0 0.0
        %632 = vmatpush2.msra.mxu0 0.0
        %633 = vmatprep.subr.mxu0 0.0
        %634 = vmatpush2.msra.mxu0 0.0
        %635 = vmatprep.subr.mxu0 0.0
        %636 = vmatpush2.msra.mxu0 0.0
        %637 = vmatprep.subr.mxu0 0.0
        %638 = vmatpush2.msra.mxu0 0.0
        %639 = vmatprep.subr.mxu0 0.0
        %640 = vmatpush2.msra.mxu0 0.0
        %641 = vmatprep.subr.mxu0 0.0
        %642 = vmatpush2.msra.mxu0 0.0
        %643 = vmatprep.mubr.f32.mxu0 0.0
        %644 = vmatmul.mubr.f32.gmra.mxu0 %v574
        %v645 = vpop.f32.mrf.mxu0
        %v646 = vadd.f32 %v562, %v645
        %v647 = vpop.f32.mrf.mxu0
        %v648 = vadd.f32 %v564, %v647
        %649 = vmatprep.mubr.f32.mxu0 0.0
        %650 = vmatmul.mubr.f32.gmra.mxu0 %v577
        %v651 = vpop.f32.mrf.mxu0
        %v652 = vadd.f32 %v568, %v651
        %v653 = vpop.f32.mrf.mxu0
        %v654 = vadd.f32 %v570, %v653
        %655 = vdwg.mxu0
        %v656 = vld [vmem:[%s4] sm:$0xff]
        %v657 = vld [vmem:[%s4 + $0x8] sm:$0x7]
        %659 = vset.pattern.permute.xlu0 0
        %660 = vperm.xlu0 %659, %v656
        %v661 = vpop.permute.xlu0 %660
        %664 = vset.pattern.permute.xlu0 0
        %665 = vperm.xlu0 %664, %v657
        %v666 = vpop.permute.xlu0 %665
        %v668 = vadd.f32 %v646, %v661
        %v669 = vadd.f32 %v648, %v661
        %v670 = vadd.f32 %v652, %v666
        %v671 = vadd.f32 %v654, %v666
        %v672 = vmul.f32 %v668, 0.5
        %v673 = vmul.f32 %v669, 0.5
        %v674 = vmul.f32 %v670, 0.5
        %v675 = vmul.f32 %v671, 0.5
        %v676 = vtanh.pop %v672
        %v677 = vtanh.pop %v673
        %v678 = vtanh.pop %v674
        %v679 = vtanh.pop %v675
        %v680 = vmul.f32 %v676, 0.5
        %v681 = vmul.f32 %v677, 0.5
        %v682 = vmul.f32 %v678, 0.5
        %v683 = vmul.f32 %v679, 0.5
        %v684 = vadd.f32 %v680, 0.5
        %v685 = vadd.f32 %v681, 0.5
        %v686 = vadd.f32 %v682, 0.5
        %v687 = vadd.f32 %v683, 0.5
        %v688 = vadd.f32 %v472, %v684
        %v689 = vadd.f32 %v473, %v685
        %v692 = vcombine.low %v686, %v687
        %v694 = vadd.f32 %v474, %v692
        %v696 = vcombine.high %v694, %v694
        %v698 = vsel %vm483, %v480, 0
        %v700 = vsel %vm490, %v694, 0
        %v702 = vsel %vm490, %v696, 0
        %704 = vmatprep.subr.mxu0 0.0
        %705 = vmatpush1.msra.mxu0 0.0
        %706 = vmatprep.subr.mxu0 0.0
        %707 = vmatpush1.msra.mxu0 0.0
        %708 = vmatprep.subr.mxu0 0.0
        %709 = vmatpush1.msra.mxu0 0.0
        %710 = vmatprep.subr.mxu0 0.0
        %711 = vmatpush1.msra.mxu0 0.0
        %712 = vmatprep.subr.mxu0 0.0
        %713 = vmatpush1.msra.mxu0 0.0
        %714 = vmatprep.subr.mxu0 0.0
        %715 = vmatpush1.msra.mxu0 0.0
        %716 = vmatprep.subr.mxu0 0.0
        %717 = vmatpush1.msra.mxu0 0.0
        %718 = vmatprep.subr.mxu0 0.0
        %719 = vmatpush1.msra.mxu0 0.0
        %720 = vmatprep.subr.mxu0 0.0
        %721 = vmatpush1.msra.mxu0 0.0
        %722 = vmatprep.subr.mxu0 0.0
        %723 = vmatpush1.msra.mxu0 0.0
        %724 = vmatprep.subr.mxu0 0.0
        %725 = vmatpush1.msra.mxu0 0.0
        %726 = vmatprep.subr.mxu0 0.0
        %727 = vmatpush1.msra.mxu0 0.0
        %728 = vmatprep.subr.mxu0 0.0
        %729 = vmatpush1.msra.mxu0 0.0
        %730 = vmatprep.subr.mxu0 0.0
        %731 = vmatpush1.msra.mxu0 0.0
        %732 = vmatprep.subr.mxu0 0.0
        %733 = vmatpush1.msra.mxu0 0.0
        %734 = vmatprep.subr.mxu0 %v702
        %735 = vmatpush1.msra.mxu0 %v700
        %736 = vmatprep.subr.mxu0 0.0
        %737 = vmatpush2.msra.mxu0 0.0
        %738 = vmatprep.subr.mxu0 0.0
        %739 = vmatpush2.msra.mxu0 0.0
        %740 = vmatprep.subr.mxu0 0.0
        %741 = vmatpush2.msra.mxu0 0.0
        %742 = vmatprep.subr.mxu0 0.0
        %743 = vmatpush2.msra.mxu0 0.0
        %744 = vmatprep.subr.mxu0 0.0
        %745 = vmatpush2.msra.mxu0 0.0
        %746 = vmatprep.subr.mxu0 0.0
        %747 = vmatpush2.msra.mxu0 0.0
        %748 = vmatprep.subr.mxu0 0.0
        %749 = vmatpush2.msra.mxu0 0.0
        %750 = vmatprep.subr.mxu0 0.0
        %751 = vmatpush2.msra.mxu0 0.0
        %752 = vmatprep.subr.mxu0 0.0
        %753 = vmatpush2.msra.mxu0 0.0
        %754 = vmatprep.subr.mxu0 0.0
        %755 = vmatpush2.msra.mxu0 0.0
        %756 = vmatprep.subr.mxu0 0.0
        %757 = vmatpush2.msra.mxu0 0.0
        %758 = vmatprep.subr.mxu0 0.0
        %759 = vmatpush2.msra.mxu0 0.0
        %760 = vmatprep.subr.mxu0 0.0
        %761 = vmatpush2.msra.mxu0 0.0
        %762 = vmatprep.subr.mxu0 0.0
        %763 = vmatpush2.msra.mxu0 0.0
        %764 = vmatprep.subr.mxu0 0.0
        %765 = vmatpush2.msra.mxu0 0.0
        %766 = vmatprep.subr.mxu0 0.0
        %767 = vmatpush2.msra.mxu0 0.0
        %768 = vmatprep.mubr.f32.mxu0 0.0
        %769 = vmatmul.mubr.f32.gmra.mxu0 %v698
        %v770 = vpop.f32.mrf.mxu0
        %v771 = vadd.f32 0.0, %v770
        %v772 = vpop.f32.mrf.mxu0
        %v773 = vadd.f32 0.0, %v772
        %774 = vdwg.mxu0
        %v776 = vsel %vm572, %v479, 0
        %778 = vmatprep.subr.mxu0 0.0
        %779 = vmatpush1.msra.mxu0 0.0
        %780 = vmatprep.subr.mxu0 0.0
        %781 = vmatpush1.msra.mxu0 0.0
        %782 = vmatprep.subr.mxu0 0.0
        %783 = vmatpush1.msra.mxu0 0.0
        %784 = vmatprep.subr.mxu0 0.0
        %785 = vmatpush1.msra.mxu0 0.0
        %786 = vmatprep.subr.mxu0 0.0
        %787 = vmatpush1.msra.mxu0 0.0
        %788 = vmatprep.subr.mxu0 0.0
        %789 = vmatpush1.msra.mxu0 0.0
        %790 = vmatprep.subr.mxu0 0.0
        %791 = vmatpush1.msra.mxu0 0.0
        %792 = vmatprep.subr.mxu0 0.0
        %793 = vmatpush1.msra.mxu0 0.0
        %794 = vmatprep.subr.mxu0 0.0
        %795 = vmatpush1.msra.mxu0 0.0
        %796 = vmatprep.subr.mxu0 0.0
        %797 = vmatpush1.msra.mxu0 0.0
        %798 = vmatprep.subr.mxu0 0.0
        %799 = vmatpush1.msra.mxu0 0.0
        %800 = vmatprep.subr.mxu0 0.0
        %801 = vmatpush1.msra.mxu0 0.0
        %802 = vmatprep.subr.mxu0 0.0
        %803 = vmatpush1.msra.mxu0 0.0
        %804 = vmatprep.subr.mxu0 0.0
        %805 = vmatpush1.msra.mxu0 0.0
        %806 = vmatprep.subr.mxu0 0.0
        %807 = vmatpush1.msra.mxu0 0.0
        %808 = vmatprep.subr.mxu0 %v689
        %809 = vmatpush1.msra.mxu0 %v688
        %810 = vmatprep.subr.mxu0 0.0
        %811 = vmatpush2.msra.mxu0 0.0
        %812 = vmatprep.subr.mxu0 0.0
        %813 = vmatpush2.msra.mxu0 0.0
        %814 = vmatprep.subr.mxu0 0.0
        %815 = vmatpush2.msra.mxu0 0.0
        %816 = vmatprep.subr.mxu0 0.0
        %817 = vmatpush2.msra.mxu0 0.0
        %818 = vmatprep.subr.mxu0 0.0
        %819 = vmatpush2.msra.mxu0 0.0
        %820 = vmatprep.subr.mxu0 0.0
        %821 = vmatpush2.msra.mxu0 0.0
        %822 = vmatprep.subr.mxu0 0.0
        %823 = vmatpush2.msra.mxu0 0.0
        %824 = vmatprep.subr.mxu0 0.0
        %825 = vmatpush2.msra.mxu0 0.0
        %826 = vmatprep.subr.mxu0 0.0
        %827 = vmatpush2.msra.mxu0 0.0
        %828 = vmatprep.subr.mxu0 0.0
        %829 = vmatpush2.msra.mxu0 0.0
        %830 = vmatprep.subr.mxu0 0.0
        %831 = vmatpush2.msra.mxu0 0.0
        %832 = vmatprep.subr.mxu0 0.0
        %833 = vmatpush2.msra.mxu0 0.0
        %834 = vmatprep.subr.mxu0 0.0
        %835 = vmatpush2.msra.mxu0 0.0
        %836 = vmatprep.subr.mxu0 0.0
        %837 = vmatpush2.msra.mxu0 0.0
        %838 = vmatprep.subr.mxu0 0.0
        %839 = vmatpush2.msra.mxu0 0.0
        %840 = vmatprep.subr.mxu0 0.0
        %841 = vmatpush2.msra.mxu0 0.0
        %842 = vmatprep.mubr.f32.mxu0 0.0
        %843 = vmatmul.mubr.f32.gmra.mxu0 %v776
        %v844 = vpop.f32.mrf.mxu0
        %v845 = vadd.f32 %v771, %v844
        %v846 = vpop.f32.mrf.mxu0
        %v847 = vadd.f32 %v773, %v846
        %848 = vdwg.mxu0
        %v849 = vld [vmem:[%s7] sm:$0xff]
        %851 = vset.pattern.permute.xlu0 0
        %852 = vperm.xlu0 %851, %v849
        %v853 = vpop.permute.xlu0 %852
        %v855 = vadd.f32 %v845, %v853
        %v856 = vadd.f32 %v847, %v853
        %857 = vst [vmem:[%s459] sm:$0xff] %v668
        %858 = vst [vmem:[%s459 + $0x8] sm:$0xff] %v669
        %859 = vst [vmem:[%s459 + $0x10] sm:$0x7] %v670
        %860 = vst [vmem:[%s459 + $0x18] sm:$0x7] %v671
        %861 = vst [vmem:[%s469] sm:$0xff] %v684
        %862 = vst [vmem:[%s469 + $0x8] sm:$0xff] %v685
        %863 = vst [vmem:[%s469 + $0x10] sm:$0x7] %v686
        %864 = vst [vmem:[%s469 + $0x18] sm:$0x7] %v687
        %865 = vst [vmem:[%s430] sm:$0xff] %v855
        %866 = vst [vmem:[%s430 + $0x8] sm:$0xff] %v856
        %s867 = smul.u32 2, %s30
        %p868 = scmp.lt.s32.totalorder %s29, 1
        %s869 = scalar_select %p868, %s29, 1
        %p870 = scmp.lt.s32.totalorder %s867, 1
        %s871 = scalar_select %p870, %s867, 1
        %s872 = smul.addr %s869, 4
        %s873 = sadd.s32 %s871, %s872
        %s874 = smul.addr %s873, 8
        %s875 = scalar_lea.vmem %s8, %s874
        %s876 = smul.u32 2, %s30
        %p877 = scmp.lt.s32.totalorder %s29, 1
        %s878 = scalar_select %p877, %s29, 1
        %p879 = scmp.lt.s32.totalorder %s876, 1
        %s880 = scalar_select %p879, %s876, 1
        %s881 = smul.addr %s878, 4
        %s882 = sadd.s32 %s880, %s881
        %s883 = smul.addr %s882, 8
        %s884 = scalar_lea.vmem %s9, %s883
        %s885 = sand.u32 %s285, 1
        %s886 = scalar_lea.sflag [#allocation3], %s885
        %s887 = sand.u32 %s285, 1
        %s888 = smul.addr %s887, 16
        %s889 = scalar_lea.vmem [#allocation2], %s888
        // Predicated region
        $region53: #{tpu_custom_call.1} parent=51 // pred_check
          %p890 = pneg %p239
        $region54: #{tpu_custom_call.1} parent=51 // pred_check_branch
          %892 = sbr.rel (%p890) target = $region56
        $region55: #{tpu_custom_call.1} parent=51 // pred_region
          %s893 = smul.u32 2, %s30
        $region56: #{tpu_custom_call.1} parent=51 // pred_fallthru
          _
        // Predicated region
        $region57: #{tpu_custom_call.1} parent=51 // pred_check
          %p894 = pneg %p267
        $region58: #{tpu_custom_call.1} parent=51 // pred_check_branch
          %896 = sbr.rel (%p894) target = $region60
        $region59: #{tpu_custom_call.1} parent=51 // pred_region
          %s897 = smul.u32 2, %s30
        $region60: #{tpu_custom_call.1} parent=51 // pred_fallthru
          _
        // Predicated region
        $region61: #{tpu_custom_call.1} parent=51 // pred_check
          %p898 = pneg %p295
        $region62: #{tpu_custom_call.1} parent=51 // pred_check_branch
          %900 = sbr.rel (%p898) target = $region64
        $region63: #{tpu_custom_call.1} parent=51 // pred_region
          %s901 = smul.u32 2, %s30
          %s903 = ssub.s32 256, 256
          %904 = vsyncadd %s886, %s903
          %s905 = smul.addr %s29, 2
          %s906 = sadd.s32 %s901, %s905
          %s907 = smul.addr %s906, 128
          %s908 = scalar_lea.hbm %s10, %s907
          %s910 = sshll.u32 %s889, 4
          %s911 = int_to_ptr.vmem [resolvable:$true] %s910
          %913 = dma.vmem_to_hbm [thread:$0]  %s911, 256, %s908, %s886
        $region64: #{tpu_custom_call.1} parent=51 // pred_fallthru
          _
      $region52: #{tpu_custom_call.1} parent=5 // pred_fallthru
        _
      %p914 = scmp.le.s32.totalorder 2, %s20
      // Predicated region
      $region65: #{tpu_custom_call.1} parent=5 // pred_check
        %p915 = pneg %p914
      $region66: #{tpu_custom_call.1} parent=5 // pred_check_branch
        %917 = sbr.rel (%p915) target = $region68
      $region67: #{tpu_custom_call.1} parent=5 // pred_region
        %s918 = ssub.s32 %s20, 2
        // Predicated region
        $region69: #{tpu_custom_call.1} parent=67 // pred_check
          %p919 = pneg %p245
        $region70: #{tpu_custom_call.1} parent=67 // pred_check_branch
          %921 = sbr.rel (%p919) target = $region72
        $region71: #{tpu_custom_call.1} parent=67 // pred_region
          %s922 = smul.u32 2, %s32
          %p923 = scmp.lt.s32.totalorder %s31, 1
          %s924 = scalar_select %p923, %s31, 1
          %p925 = scmp.lt.s32.totalorder %s922, 1
          %s926 = scalar_select %p925, %s922, 1
          %s927 = smul.addr %s924, 4
          %s928 = sadd.s32 %s926, %s927
          %s929 = smul.addr %s928, 8
          %s930 = scalar_lea.vmem %s8, %s929
        $region72: #{tpu_custom_call.1} parent=67 // pred_fallthru
          _
        // Predicated region
        $region73: #{tpu_custom_call.1} parent=67 // pred_check
          %p931 = pneg %p273
        $region74: #{tpu_custom_call.1} parent=67 // pred_check_branch
          %933 = sbr.rel (%p931) target = $region76
        $region75: #{tpu_custom_call.1} parent=67 // pred_region
          %s934 = smul.u32 2, %s32
          %p935 = scmp.lt.s32.totalorder %s31, 1
          %s936 = scalar_select %p935, %s31, 1
          %p937 = scmp.lt.s32.totalorder %s934, 1
          %s938 = scalar_select %p937, %s934, 1
          %s939 = smul.addr %s936, 4
          %s940 = sadd.s32 %s938, %s939
          %s941 = smul.addr %s940, 8
          %s942 = scalar_lea.vmem %s9, %s941
        $region76: #{tpu_custom_call.1} parent=67 // pred_fallthru
          _
        // Predicated region
        $region77: #{tpu_custom_call.1} parent=67 // pred_check
          %p943 = pneg %p301
        $region78: #{tpu_custom_call.1} parent=67 // pred_check_branch
          %945 = sbr.rel (%p943) target = $region80
        $region79: #{tpu_custom_call.1} parent=67 // pred_region
          %s946 = sand.u32 %s286, 1
          %s947 = scalar_lea.sflag [#allocation3], %s946
          %s948 = sand.u32 %s286, 1
          %s949 = smul.addr %s948, 16
          %s950 = scalar_lea.vmem [#allocation2], %s949
          %951 = dma.done %s947, 256
        $region80: #{tpu_custom_call.1} parent=67 // pred_fallthru
          _
      $region68: #{tpu_custom_call.1} parent=5 // pred_fallthru
        _
    $region6: #{tpu_custom_call.1} parent=1 // loop_footer
      %s24 = sadd.s32 1, %s20
    $region7: #{tpu_custom_call.1} parent=1 // loop_footer_branch
      %19 = sbr.rel target = $region3
    $region8: #{tpu_custom_call.1} parent=1 // loop_exit
      _
    %952 = vsyncpa [#allocation3], 1
    %s953 = scalar_lea.sflag [#allocation3], 1
    %954 = vsyncpa %s953, 1

</llo_original>
